<compile_context>
chip_gen: v6e
topology: v6e:2x2x1
jax: 0.10.0
libtpu: 0.0.40
codegen_flags: <defaults>
</compile_context>

<pallas_src>
import math

import jax
import jax.numpy as jnp
from jax.experimental import pallas as pl
from jax.experimental.pallas import tpu as pltpu


# ----------------------------------------------------------------------------
# Stage 1: tiny MLP -> alpha, beta and fused affine params (plain XLA, once)
# ----------------------------------------------------------------------------
def _compute_affine_params(mu, sigma, w1, b1, w2, b2):
    """stats=[mu,sigma] -> Linear -> SiLU -> Linear -> (alpha, beta), then fold
    (x - mu)/sigma*alpha + beta into x*scale + shift."""
    f32 = jnp.float32
    mu32 = mu.astype(f32)
    sg32 = sigma.astype(f32)
    stats = jnp.concatenate([mu32, sg32], axis=-1)          # (B, 2D)
    h = stats @ w1.astype(f32) + b1.astype(f32)              # (B, H)
    h = h * jax.nn.sigmoid(h)                                 # SiLU
    ab = h @ w2.astype(f32) + b2.astype(f32)                  # (B, 2D)
    D = mu.shape[-1]
    alpha, beta = ab[:, :D], ab[:, D:]
    scale = alpha / sg32                                      # no epsilon (matches torch ref)
    shift = beta - mu32 * scale
    return alpha, beta, scale, shift


# ----------------------------------------------------------------------------
# Stage 2: streaming affine apply (shared body for both layouts)
# ----------------------------------------------------------------------------
def _affine_stream_kernel(x_ref, scale_ref, shift_ref, o_ref):
    # scale/shift blocks are (1, 1, l_blk) or (r_blk, 1): broadcast in-kernel
    # (sublane / lane broadcast on the VPU — free in an HBM-bound stream).
    x = x_ref[...].astype(jnp.float32)
    o_ref[...] = (x * scale_ref[...] + shift_ref[...]).astype(o_ref.dtype)


# ----------------------------------------------------------------------------
# Block-size helpers (cap is in *bytes*, cdiv grids handle non-dividing dims)
# ----------------------------------------------------------------------------
def _round_down(x, m):
    return (x // m) * m


def _pick_lane_block(full, cap_elems):
    """Lane-axis block: multiple of 128, or the full dim (always legal)."""
    cap_elems = max(128, cap_elems)
    if full <= cap_elems:
        return full
    return _round_down(cap_elems, 128)


def _pick_row_block(full, cap_elems):
    """Sublane-axis block: multiple of 8, or the full dim (always legal)."""
    cap_elems = max(8, cap_elems)
    if full <= cap_elems:
        return full
    return _round_down(cap_elems, 8)


def _stream_compiler_params(n_axes):
    return pltpu.CompilerParams(
        dimension_semantics=("parallel",) * n_axes,   # pure elementwise: all parallel
        vmem_limit_bytes=32 * 1024 * 1024,            # safe on v5e/v6e/v7x; >> our need
    )


def _stream_cost(x):
    nbytes = int(x.size) * jnp.dtype(x.dtype).itemsize
    return pl.CostEstimate(flops=2 * int(x.size), transcendentals=0,
                           bytes_accessed=2 * nbytes)


# ----------------------------------------------------------------------------
# Wrapper
# ----------------------------------------------------------------------------
def adaptive_normalizer_mlp_forward(x, mu, sigma, w1, b1, w2, b2,
                                    *, feature_dim=None, block_bytes=2 << 20):
    """AdaptiveNormalizerMLP.forward.

    x: (B, T, D) or (B, D, T); mu, sigma: (B, D).
    w1: (2D, H), b1: (H,), w2: (H, 2D), b2: (2D,)  (nn.Linear weights, transposed).
    block_bytes: target size of one streaming x block (per buffer).

    Returns (x_norm, {'alpha': (B, D), 'beta': (B, D)}).
    """
    if feature_dim is None:
        feature_dim = mu.shape[-1]
    B, D = mu.shape
    itemsize = jnp.dtype(x.dtype).itemsize

    alpha, beta, scale, shift = _compute_affine_params(mu, sigma, w1, b1, w2, b2)
    params = {"alpha": alpha, "beta": beta}

    lane_cap = max(128, block_bytes // (8 * itemsize))

    if x.ndim == 3 and x.shape[-1] == feature_dim:
        # ---------------- channels-last (B, T, D) ----------------
        _, T, _ = x.shape
        if D % 128 == 0:
            g = 1                                   # already lane-dense
        else:
            g = 128 // math.gcd(D, 128)             # fold g time-steps -> lcm(D,128) lanes
            if T % g != 0:
                g = 1                               # irregular T: keep (T, D) blocks
        M, L = T // g, D * g
        xv = x.reshape(B, M, L)                     # contiguous reshape: free
        # per-lane params repeat with period D; tiled only to one lane row (tiny)
        scale_v = jnp.tile(scale, (1, g)).reshape(B, 1, L)
        shift_v = jnp.tile(shift, (1, g)).reshape(B, 1, L)

        l_blk = _pick_lane_block(L, lane_cap)
        m_blk = _pick_row_block(M, max(8, block_bytes // (l_blk * itemsize)))
        grid = (B, pl.cdiv(M, m_blk), pl.cdiv(L, l_blk))

        out = pl.pallas_call(
            _affine_stream_kernel,
            out_shape=jax.ShapeDtypeStruct((B, M, L), x.dtype),
            grid=grid,
            in_specs=[pl.BlockSpec((1, m_blk, l_blk), lambda b, i, j: (b, i, j)),
                      pl.BlockSpec((1, 1, l_blk), lambda b, i, j: (b, 0, j)),
                      pl.BlockSpec((1, 1, l_blk), lambda b, i, j: (b, 0, j))],
            out_specs=pl.BlockSpec((1, m_blk, l_blk), lambda b, i, j: (b, i, j)),
            compiler_params=_stream_compiler_params(3),
            cost_estimate=_stream_cost(x),
        )(xv, scale_v, shift_v)
        x_norm = out.reshape(B, T, D)

    elif x.ndim == 3 and x.shape[1] == feature_dim:
        # ---------------- channels-first (B, D, T) ----------------
        _, _, T = x.shape
        rows = B * D
        xv = x.reshape(rows, T)                     # full sublane density for small D
        scale_v = scale.reshape(rows, 1)            # broadcast along lanes in-kernel
        shift_v = shift.reshape(rows, 1)

        t_blk = _pick_lane_block(T, lane_cap)
        r_blk = _pick_row_block(rows, max(8, block_bytes // (t_blk * itemsize)))
        grid = (pl.cdiv(rows, r_blk), pl.cdiv(T, t_blk))

        out = pl.pallas_call(
            _affine_stream_kernel,
            out_shape=jax.ShapeDtypeStruct((rows, T), x.dtype),
            grid=grid,
            in_specs=[pl.BlockSpec((r_blk, t_blk), lambda i, j: (i, j)),
                      pl.BlockSpec((r_blk, 1), lambda i, j: (i, 0)),
                      pl.BlockSpec((r_blk, 1), lambda i, j: (i, 0))],
            out_specs=pl.BlockSpec((r_blk, t_blk), lambda i, j: (i, j)),
            compiler_params=_stream_compiler_params(2),
            cost_estimate=_stream_cost(x),
        )(xv, scale_v, shift_v)
        x_norm = out.reshape(B, D, T)

    else:
        raise ValueError(
            f"AdaptiveNormalizerMLP: expected x of shape (B, T, {feature_dim}) "
            f"or (B, {feature_dim}, T), got {tuple(x.shape)}")

    return x_norm, params


# ----------------------------------------------------------------------------
# Pure-JAX reference (mirrors the PyTorch module, channels-last layout)
# ----------------------------------------------------------------------------
def _reference_forward(x, mu, sigma, w1, b1, w2, b2):
    stats = jnp.concatenate([mu, sigma], axis=-1)
    h = stats @ w1 + b1
    h = h * jax.nn.sigmoid(h)
    ab = h @ w2 + b2
    D = mu.shape[-1]
    alpha, beta = ab[:, :D], ab[:, D:]
    x_norm = (x - mu[:, None, :]) / sigma[:, None, :] * alpha[:, None, :] + beta[:, None, :]
    return x_norm, alpha, beta


if __name__ == "__main__":
    B, T, D, H = 2, 8, 4, 32

    key = jax.random.PRNGKey(0)
    kx, kmu, ksig, kw1, kb1, kw2, kb2 = jax.random.split(key, 7)

    x = jax.random.normal(kx, (B, T, D), dtype=jnp.float32)
    mu = jax.random.normal(kmu, (B, D), dtype=jnp.float32)
    sigma = jnp.abs(jax.random.normal(ksig, (B, D), dtype=jnp.float32)) + 0.5

    # nn.Linear weights, transposed to (in, out).
    w1 = jax.random.normal(kw1, (2 * D, H), dtype=jnp.float32) * 0.1
    b1 = jax.random.normal(kb1, (H,), dtype=jnp.float32) * 0.1
    w2 = jax.random.normal(kw2, (H, 2 * D), dtype=jnp.float32) * 0.1
    b2 = jax.random.normal(kb2, (2 * D,), dtype=jnp.float32) * 0.1

    # 1) channels-last (B, T, D), tiny shape.
    x_norm, params = adaptive_normalizer_mlp_forward(x, mu, sigma, w1, b1, w2, b2)
    jax.block_until_ready((x_norm, params["alpha"], params["beta"]))
    xr, ar, br = _reference_forward(x, mu, sigma, w1, b1, w2, b2)
    assert jnp.allclose(x_norm, xr, atol=1e-5, rtol=1e-5)
    assert jnp.allclose(params["alpha"], ar, atol=1e-5, rtol=1e-5)
    assert jnp.allclose(params["beta"], br, atol=1e-5, rtol=1e-5)

    # 2) channels-first (B, D, T), tiny shape.
    x_cf = jnp.transpose(x, (0, 2, 1))
    x_norm_cf, _ = adaptive_normalizer_mlp_forward(x_cf, mu, sigma, w1, b1, w2, b2)
    jax.block_until_ready(x_norm_cf)
    assert jnp.allclose(x_norm_cf, jnp.transpose(xr, (0, 2, 1)), atol=1e-5, rtol=1e-5)

    # 3) channels-last, T % 32 == 0 -> lane-folded (B, T/32, 128) path; small
    #    block cap forces a multi-step, pipelined grid (grid = (2, 4, 1)).
    T2 = 1024
    x2 = jax.random.normal(kx, (B, T2, D), dtype=jnp.float32)
    x_norm2, _ = adaptive_normalizer_mlp_forward(
        x2, mu, sigma, w1, b1, w2, b2, block_bytes=4096)
    jax.block_until_ready(x_norm2)
    xr2, _, _ = _reference_forward(x2, mu, sigma, w1, b1, w2, b2)
    assert jnp.allclose(x_norm2, xr2, atol=1e-5, rtol=1e-5)

    # 4) channels-last, irregular T (1000): cdiv grid with a masked boundary
    #    row block instead of a degenerate whole-array block.
    T3 = 1000
    x3 = jax.random.normal(kx, (B, T3, D), dtype=jnp.float32)
    x_norm3, _ = adaptive_normalizer_mlp_forward(
        x3, mu, sigma, w1, b1, w2, b2, block_bytes=2048)
    jax.block_until_ready(x_norm3)
    xr3, _, _ = _reference_forward(x3, mu, sigma, w1, b1, w2, b2)
    assert jnp.allclose(x_norm3, xr3, atol=1e-5, rtol=1e-5)

    # 5) channels-first, multi-step lane grid (grid = (1, 4)).
    x4 = jnp.transpose(x2, (0, 2, 1))
    x_norm4, _ = adaptive_normalizer_mlp_forward(
        x4, mu, sigma, w1, b1, w2, b2, block_bytes=8192)
    jax.block_until_ready(x_norm4)
    assert jnp.allclose(x_norm4, jnp.transpose(xr2, (0, 2, 1)), atol=1e-5, rtol=1e-5)

    # 6) native-dtype streaming path (bf16 in / bf16 out), loose tolerance.
    x2_bf = x2.astype(jnp.bfloat16)
    x_norm_bf, _ = adaptive_normalizer_mlp_forward(x2_bf, mu, sigma, w1, b1, w2, b2)
    jax.block_until_ready(x_norm_bf)
    assert x_norm_bf.dtype == jnp.bfloat16
    assert jnp.allclose(x_norm_bf.astype(jnp.float32), xr2, atol=0.1, rtol=0.1)

    print("KERNEL_OK")
</pallas_src>

<mosaic_0001>
module attributes {stable_mosaic.version = 11 : i64} {
  func.func @_affine_stream_kernel(%arg0: i32, %arg1: i32, %arg2: i32, %arg3: memref<1x8x4xf32, #tpu.memory_space<vmem>>, %arg4: memref<1x1x4xf32, #tpu.memory_space<vmem>>, %arg5: memref<1x1x4xf32, #tpu.memory_space<vmem>>, %arg6: memref<1x8x4xf32, #tpu.memory_space<vmem>>) attributes {dimension_semantics = [#tpu.dimension_semantics<parallel>, #tpu.dimension_semantics<parallel>, #tpu.dimension_semantics<parallel>], iteration_bounds = array<i64: 2, 1, 1>, scalar_prefetch = 0 : i64, scratch_operands = 0 : i64, tpu.core_type = #tpu.core_type<tc>, window_params = [{transform_indices = @transform_0, window_bounds = array<i64: 1, 8, 4>}, {transform_indices = @transform_1, window_bounds = array<i64: 1, 1, 4>}, {transform_indices = @transform_2, window_bounds = array<i64: 1, 1, 4>}, {transform_indices = @transform_3, window_bounds = array<i64: 1, 8, 4>}]} {
    %c0 = arith.constant 0 : index
    %c0_0 = arith.constant 0 : index
    %c0_1 = arith.constant 0 : index
    %0 = vector.load %arg3[%c0, %c0_0, %c0_1] : memref<1x8x4xf32, #tpu.memory_space<vmem>>, vector<1x8x4xf32>
    %c0_2 = arith.constant 0 : index
    %c0_3 = arith.constant 0 : index
    %c0_4 = arith.constant 0 : index
    %1 = vector.load %arg4[%c0_2, %c0_3, %c0_4] : memref<1x1x4xf32, #tpu.memory_space<vmem>>, vector<1x1x4xf32>
    %2 = vector.broadcast %1 : vector<1x1x4xf32> to vector<1x8x4xf32>
    %3 = arith.mulf %0, %2 : vector<1x8x4xf32>
    %c0_5 = arith.constant 0 : index
    %c0_6 = arith.constant 0 : index
    %c0_7 = arith.constant 0 : index
    %4 = vector.load %arg5[%c0_5, %c0_6, %c0_7] : memref<1x1x4xf32, #tpu.memory_space<vmem>>, vector<1x1x4xf32>
    %5 = vector.broadcast %4 : vector<1x1x4xf32> to vector<1x8x4xf32>
    %6 = arith.addf %3, %5 : vector<1x8x4xf32>
    %c0_8 = arith.constant 0 : index
    %c0_9 = arith.constant 0 : index
    %c0_10 = arith.constant 0 : index
    %7 = vector.load %arg6[%c0_8, %c0_9, %c0_10] : memref<1x8x4xf32, #tpu.memory_space<vmem>>, vector<1x8x4xf32>
    tpu.vector_store %arg6[%c0_8, %c0_9, %c0_10], %6 {strides = array<i32>} : memref<1x8x4xf32, #tpu.memory_space<vmem>>, vector<1x8x4xf32>,
    return
  }
  func.func @transform_0(%arg0: i32, %arg1: i32, %arg2: i32) -> (i32, i32, i32) {
    %c0_i32 = arith.constant 0 : i32
    return %arg0, %arg1, %arg2 : i32, i32, i32
  }
  func.func @transform_1(%arg0: i32, %arg1: i32, %arg2: i32) -> (i32, i32, i32) {
    %c0_i32 = arith.constant 0 : i32
    %c0_i32_0 = arith.constant 0 : i32
    return %arg0, %c0_i32, %arg2 : i32, i32, i32
  }
  func.func @transform_2(%arg0: i32, %arg1: i32, %arg2: i32) -> (i32, i32, i32) {
    %c0_i32 = arith.constant 0 : i32
    %c0_i32_0 = arith.constant 0 : i32
    return %arg0, %c0_i32, %arg2 : i32, i32, i32
  }
  func.func @transform_3(%arg0: i32, %arg1: i32, %arg2: i32) -> (i32, i32, i32) {
    %c0_i32 = arith.constant 0 : i32
    return %arg0, %arg1, %arg2 : i32, i32, i32
  }
}

</mosaic_0001>

<llo_original>
// kernel: tpu_custom_call.1
$region0: #{tpu_custom_call.1}
  #allocation0 [shape = 'u32[]', space=smem, size = 0x4, offset = 0x4, fixed_abs, tag = 'smem constant byte address 0x4 - core index']
  #allocation1 [shape = 'u32[144,128]{1,0:T(1,128)}', space=vmem, size = 0x12000, scoped, tag = 'internal scratch']
  %s0 = inlined_call_operand.vmem [shape: f32[2,8,4], index: 0, kind: input, shape index: {}]
  %s1 = inlined_call_operand.vmem [shape: f32[2,1,4], index: 1, kind: input, shape index: {}]
  %s2 = inlined_call_operand.vmem [shape: f32[2,1,4], index: 2, kind: input, shape index: {}]
  %s3 = inlined_call_operand.vmem [shape: f32[2,8,4], index: 3, kind: output, shape index: {}]
  %s4 = sld [smem:[#allocation0]]
  $region45: #{tpu_custom_call.1} parent=0
    _
  %s6 = ssub.s32 1, %s4
  %s7 = scalar_select 0, %s6, %s4
  loop: start=0, step=1, limit=4
  $region2: #{tpu_custom_call.1} parent=0 // loop_pre_header
    _
  $region3: #{tpu_custom_call.1} parent=0 // loop_header
    %s9 = sphi 0, %s13
    %p10 = scmp.ge.s32.totalorder %s9, 4
    %s16 = sphi 0, %s35
    %s17 = sphi 0, %s31
    %s18 = sphi 0, %s27
    %s19 = sphi 0, %s16
    %s20 = sphi 0, %s17
    %s21 = sphi 0, %s18
    %s22 = sphi 0, %s19
    %s23 = sphi 0, %s20
    %s24 = sphi 0, %s21
    %s42 = sphi 0, %s44
    %s45 = sphi 0, %s42
    %s46 = sphi 0, %s45
    %s62 = sphi 0, %s46
    %s70 = sphi 0, %s72
    %s73 = sphi 0, %s70
    %s74 = sphi 0, %s73
    %s90 = sphi 0, %s74
    %s98 = sphi 0, %s100
    %s101 = sphi 0, %s98
    %s102 = sphi 0, %s101
    %s118 = sphi 0, %s102
    %s128 = sphi 0, %s130
    %s131 = sphi 0, %s128
    %s132 = sphi 0, %s131
    %s148 = sphi 0, %s132
  $region4: #{tpu_custom_call.1} parent=0 // loop_header_branch
    %12 = sbr.rel (%p10) target = $region8
  $region5: #{tpu_custom_call.1} parent=0 // loop_body
    %s14 = ssub.s32 %s9, 1
    %s15 = ssub.s32 %s9, 2
    %s25 = sadd.s32 1, %s18
    %p26 = scmp.ge.s32.totalorder %s25, 1
    %s27 = scalar_select %p26, 0, %s25
    %s28 = sadd.s32 1, %s17
    %s29 = scalar_select %p26, %s28, %s17
    %p30 = scmp.ge.s32.totalorder %s29, 1
    %s31 = scalar_select %p30, 0, %s29
    %s32 = sadd.s32 1, %s16
    %s33 = scalar_select %p30, %s32, %s16
    %p34 = scmp.ge.s32.totalorder %s33, 2
    %s35 = scalar_select %p34, 0, %s33
    %s36 = ssub.s32 %s16, %s35
    %s37 = ssub.s32 %s17, %s31
    %s38 = sor.u32 %s36, %s37
    %s39 = ssub.s32 %s18, %s27
    %s40 = sor.u32 %s38, %s39
    %p41 = scmp.eq.s32.totalorder %s40, 0
    %s43 = sadd.s32 %s42, 1
    %s44 = scalar_select %p41, %s42, %s43
    %p47 = pneg %p41
    %p48 = scmp.eq.s32.totalorder %s9, 1
    %p49 = por %p47, %p48
    %p50 = scmp.ne.s32.totalorder %s42, %s45
    %p51 = scmp.eq.s32.totalorder %s9, 0
    %p52 = por %p50, %p51
    %p53 = scmp.ne.s32.totalorder %s42, %s45
    %p54 = scmp.eq.s32.totalorder %s14, 1
    %p55 = por %p53, %p54
    %p56 = scmp.ne.s32.totalorder %s45, %s46
    %p57 = scmp.eq.s32.totalorder %s14, 0
    %p58 = por %p56, %p57
    %p59 = scmp.ne.s32.totalorder %s45, %s46
    %p60 = scmp.eq.s32.totalorder %s15, 1
    %p61 = por %p59, %p60
    %p63 = scmp.ne.s32.totalorder %s46, %s62
    %p64 = scmp.eq.s32.totalorder %s15, 0
    %p65 = por %p63, %p64
    %s66 = ssub.s32 %s16, %s35
    %s67 = ssub.s32 %s18, %s27
    %s68 = sor.u32 %s66, %s67
    %p69 = scmp.eq.s32.totalorder %s68, 0
    %s71 = sadd.s32 %s70, 1
    %s72 = scalar_select %p69, %s70, %s71
    %p75 = pneg %p69
    %p76 = scmp.eq.s32.totalorder %s9, 1
    %p77 = por %p75, %p76
    %p78 = scmp.ne.s32.totalorder %s70, %s73
    %p79 = scmp.eq.s32.totalorder %s9, 0
    %p80 = por %p78, %p79
    %p81 = scmp.ne.s32.totalorder %s70, %s73
    %p82 = scmp.eq.s32.totalorder %s14, 1
    %p83 = por %p81, %p82
    %p84 = scmp.ne.s32.totalorder %s73, %s74
    %p85 = scmp.eq.s32.totalorder %s14, 0
    %p86 = por %p84, %p85
    %p87 = scmp.ne.s32.totalorder %s73, %s74
    %p88 = scmp.eq.s32.totalorder %s15, 1
    %p89 = por %p87, %p88
    %p91 = scmp.ne.s32.totalorder %s74, %s90
    %p92 = scmp.eq.s32.totalorder %s15, 0
    %p93 = por %p91, %p92
    %s94 = ssub.s32 %s16, %s35
    %s95 = ssub.s32 %s18, %s27
    %s96 = sor.u32 %s94, %s95
    %p97 = scmp.eq.s32.totalorder %s96, 0
    %s99 = sadd.s32 %s98, 1
    %s100 = scalar_select %p97, %s98, %s99
    %p103 = pneg %p97
    %p104 = scmp.eq.s32.totalorder %s9, 1
    %p105 = por %p103, %p104
    %p106 = scmp.ne.s32.totalorder %s98, %s101
    %p107 = scmp.eq.s32.totalorder %s9, 0
    %p108 = por %p106, %p107
    %p109 = scmp.ne.s32.totalorder %s98, %s101
    %p110 = scmp.eq.s32.totalorder %s14, 1
    %p111 = por %p109, %p110
    %p112 = scmp.ne.s32.totalorder %s101, %s102
    %p113 = scmp.eq.s32.totalorder %s14, 0
    %p114 = por %p112, %p113
    %p115 = scmp.ne.s32.totalorder %s101, %s102
    %p116 = scmp.eq.s32.totalorder %s15, 1
    %p117 = por %p115, %p116
    %p119 = scmp.ne.s32.totalorder %s102, %s118
    %p120 = scmp.eq.s32.totalorder %s15, 0
    %p121 = por %p119, %p120
    %s122 = ssub.s32 %s16, %s35
    %s123 = ssub.s32 %s17, %s31
    %s124 = sor.u32 %s122, %s123
    %s125 = ssub.s32 %s18, %s27
    %s126 = sor.u32 %s124, %s125
    %p127 = scmp.eq.s32.totalorder %s126, 0
    %s129 = sadd.s32 %s128, 1
    %s130 = scalar_select %p127, %s128, %s129
    %p133 = pneg %p127
    %p134 = scmp.eq.s32.totalorder %s9, 1
    %p135 = por %p133, %p134
    %p136 = scmp.ne.s32.totalorder %s128, %s131
    %p137 = scmp.eq.s32.totalorder %s9, 0
    %p138 = por %p136, %p137
    %p139 = scmp.ne.s32.totalorder %s128, %s131
    %p140 = scmp.eq.s32.totalorder %s14, 1
    %p141 = por %p139, %p140
    %p142 = scmp.ne.s32.totalorder %s131, %s132
    %p143 = scmp.eq.s32.totalorder %s14, 0
    %p144 = por %p142, %p143
    %p145 = scmp.ne.s32.totalorder %s131, %s132
    %p146 = scmp.eq.s32.totalorder %s15, 1
    %p147 = por %p145, %p146
    %p149 = scmp.ne.s32.totalorder %s132, %s148
    %p150 = scmp.eq.s32.totalorder %s15, 0
    %p151 = por %p149, %p150
    %p152 = scmp.le.s32.totalorder 1, %s9
    %p153 = scmp.lt.s32.totalorder %s9, 3
    %p154 = pnand %p152, %p153
    %p155 = pneg %p154
    // Predicated region
    $region9: #{tpu_custom_call.1} parent=5 // pred_check
      _
    $region10: #{tpu_custom_call.1} parent=5 // pred_check_branch
      %157 = sbr.rel (%p154) target = $region12
    $region11: #{tpu_custom_call.1} parent=5 // pred_region
      %s158 = ssub.s32 %s9, 1
    $region12: #{tpu_custom_call.1} parent=5 // pred_fallthru
      _
    %p159 = scmp.lt.s32.totalorder %s9, 2
    // Predicated region
    $region13: #{tpu_custom_call.1} parent=5 // pred_check
      %p160 = pneg %p159
    $region14: #{tpu_custom_call.1} parent=5 // pred_check_branch
      %162 = sbr.rel (%p160) target = $region16
    $region15: #{tpu_custom_call.1} parent=5 // pred_region
      // Predicated region
      $region17: #{tpu_custom_call.1} parent=15 // pred_check
        %p163 = pneg %p52
      $region18: #{tpu_custom_call.1} parent=15 // pred_check_branch
        %165 = sbr.rel (%p163) target = $region20
      $region19: #{tpu_custom_call.1} parent=15 // pred_region
        %p166 = scmp.lt.s32.totalorder %s16, 1
        %s167 = scalar_select %p166, %s16, 1
        %p168 = scmp.lt.s32.totalorder %s17, 0
        %s169 = scalar_select %p168, %s17, 0
        %p170 = scmp.lt.s32.totalorder %s18, 0
        %s171 = scalar_select %p170, %s18, 0
        %s172 = sadd.s32 %s171, %s169
        %s173 = sadd.s32 %s172, %s167
        %s174 = smul.addr %s173, 8
        %s175 = scalar_lea.vmem %s0, %s174
      $region20: #{tpu_custom_call.1} parent=15 // pred_fallthru
        _
      // Predicated region
      $region21: #{tpu_custom_call.1} parent=15 // pred_check
        %p176 = pneg %p80
      $region22: #{tpu_custom_call.1} parent=15 // pred_check_branch
        %178 = sbr.rel (%p176) target = $region24
      $region23: #{tpu_custom_call.1} parent=15 // pred_region
        %p179 = scmp.lt.s32.totalorder %s16, 1
        %s180 = scalar_select %p179, %s16, 1
        %p181 = scmp.lt.s32.totalorder %s18, 0
        %s182 = scalar_select %p181, %s18, 0
        %s183 = sadd.s32 %s182, %s180
        %s184 = scalar_lea.vmem %s1, %s183
      $region24: #{tpu_custom_call.1} parent=15 // pred_fallthru
        _
      // Predicated region
      $region25: #{tpu_custom_call.1} parent=15 // pred_check
        %p185 = pneg %p108
      $region26: #{tpu_custom_call.1} parent=15 // pred_check_branch
        %187 = sbr.rel (%p185) target = $region28
      $region27: #{tpu_custom_call.1} parent=15 // pred_region
        %p188 = scmp.lt.s32.totalorder %s16, 1
        %s189 = scalar_select %p188, %s16, 1
        %p190 = scmp.lt.s32.totalorder %s18, 0
        %s191 = scalar_select %p190, %s18, 0
        %s192 = sadd.s32 %s191, %s189
        %s193 = scalar_lea.vmem %s2, %s192
      $region28: #{tpu_custom_call.1} parent=15 // pred_fallthru
        _
    $region16: #{tpu_custom_call.1} parent=5 // pred_fallthru
      _
    %p194 = scmp.le.s32.totalorder 1, %s9
    %p195 = scmp.lt.s32.totalorder %s9, 3
    %p196 = pnand %p194, %p195
    %p197 = pneg %p196
    // Predicated region
    $region29: #{tpu_custom_call.1} parent=5 // pred_check
      _
    $region30: #{tpu_custom_call.1} parent=5 // pred_check_branch
      %199 = sbr.rel (%p196) target = $region32
    $region31: #{tpu_custom_call.1} parent=5 // pred_region
      %s200 = ssub.s32 %s9, 1
      %p201 = scmp.lt.s32.totalorder %s19, 1
      %s202 = scalar_select %p201, %s19, 1
      %p203 = scmp.lt.s32.totalorder %s20, 0
      %s204 = scalar_select %p203, %s20, 0
      %p205 = scmp.lt.s32.totalorder %s21, 0
      %s206 = scalar_select %p205, %s21, 0
      %s207 = sadd.s32 %s206, %s204
      %s208 = sadd.s32 %s207, %s202
      %s209 = smul.addr %s208, 8
      %s210 = scalar_lea.vmem %s0, %s209
      %p211 = pneg %p58
      %p212 = pneg %p55
      %p213 = scmp.lt.s32.totalorder %s19, 1
      %s214 = scalar_select %p213, %s19, 1
      %p215 = scmp.lt.s32.totalorder %s21, 0
      %s216 = scalar_select %p215, %s21, 0
      %s217 = sadd.s32 %s216, %s214
      %s218 = scalar_lea.vmem %s1, %s217
      %p219 = pneg %p86
      %p220 = pneg %p83
      %p221 = scmp.lt.s32.totalorder %s19, 1
      %s222 = scalar_select %p221, %s19, 1
      %p223 = scmp.lt.s32.totalorder %s21, 0
      %s224 = scalar_select %p223, %s21, 0
      %s225 = sadd.s32 %s224, %s222
      %s226 = scalar_lea.vmem %s2, %s225
      %p227 = pneg %p114
      %p228 = pneg %p111
      %p229 = pneg %p144
      %p230 = pneg %p141
      %p231 = scmp.lt.s32.totalorder %s19, 1
      %s232 = scalar_select %p231, %s19, 1
      %p233 = scmp.lt.s32.totalorder %s20, 0
      %s234 = scalar_select %p233, %s20, 0
      %p235 = scmp.lt.s32.totalorder %s21, 0
      %s236 = scalar_select %p235, %s21, 0
      %s237 = sadd.s32 %s236, %s234
      %s238 = sadd.s32 %s237, %s232
      %s239 = smul.addr %s238, 8
      %s240 = scalar_lea.vmem %s3, %s239
      %p241 = scmp.lt.s32.totalorder %s19, 1
      %s242 = scalar_select %p241, %s19, 1
      %p243 = scmp.lt.s32.totalorder %s20, 0
      %s244 = scalar_select %p243, %s20, 0
      %p245 = scmp.lt.s32.totalorder %s21, 0
      %s246 = scalar_select %p245, %s21, 0
      %s247 = sadd.s32 %s246, %s244
      %s248 = sadd.s32 %s247, %s242
      %s249 = smul.addr %s248, 8
      %s250 = scalar_lea.vmem %s0, %s249
      %p251 = scmp.lt.s32.totalorder %s19, 1
      %s252 = scalar_select %p251, %s19, 1
      %p253 = scmp.lt.s32.totalorder %s21, 0
      %s254 = scalar_select %p253, %s21, 0
      %s255 = sadd.s32 %s254, %s252
      %s256 = scalar_lea.vmem %s1, %s255
      %p257 = scmp.lt.s32.totalorder %s19, 1
      %s258 = scalar_select %p257, %s19, 1
      %p259 = scmp.lt.s32.totalorder %s21, 0
      %s260 = scalar_select %p259, %s21, 0
      %s261 = sadd.s32 %s260, %s258
      %s262 = scalar_lea.vmem %s2, %s261
      %p263 = scmp.lt.s32.totalorder %s19, 1
      %s264 = scalar_select %p263, %s19, 1
      %p265 = scmp.lt.s32.totalorder %s20, 0
      %s266 = scalar_select %p265, %s20, 0
      %p267 = scmp.lt.s32.totalorder %s21, 0
      %s268 = scalar_select %p267, %s21, 0
      %s269 = sadd.s32 %s268, %s266
      %s270 = sadd.s32 %s269, %s264
      %s271 = smul.addr %s270, 8
      %s272 = scalar_lea.vmem %s3, %s271
      %v273 = vld [vmem:[%s250] sm:$0xff]
      %v274 = vld [vmem:[%s256] sm:$0x1]
      %v276 = vlaneseq
      %v277 = vshrl.u32 %v276, 7
      %v278 = vsub.s32 0, %v277
      %v279 = vrot.slane %v274, %v278
      %v281 = vmul.f32 %v273, %v279
      %v282 = vld [vmem:[%s262] sm:$0x1]
      %v284 = vlaneseq
      %v285 = vshrl.u32 %v284, 7
      %v286 = vsub.s32 0, %v285
      %v287 = vrot.slane %v282, %v286
      %v289 = vadd.f32 %v281, %v287
      %vm290 = vcmask 31744
      %291 = vst.msk [vmem:[%s272] sm:$0xff] %vm290, %v289
      %p292 = scmp.lt.s32.totalorder %s19, 1
      %s293 = scalar_select %p292, %s19, 1
      %p294 = scmp.lt.s32.totalorder %s20, 0
      %s295 = scalar_select %p294, %s20, 0
      %p296 = scmp.lt.s32.totalorder %s21, 0
      %s297 = scalar_select %p296, %s21, 0
      %s298 = sadd.s32 %s297, %s295
      %s299 = sadd.s32 %s298, %s293
      %s300 = smul.addr %s299, 8
      %s301 = scalar_lea.vmem %s3, %s300
      // Predicated region
      $region33: #{tpu_custom_call.1} parent=31 // pred_check
        %p302 = pneg %p141
      $region34: #{tpu_custom_call.1} parent=31 // pred_check_branch
        %304 = sbr.rel (%p302) target = $region36
      $region35: #{tpu_custom_call.1} parent=31 // pred_region
        _
      $region36: #{tpu_custom_call.1} parent=31 // pred_fallthru
        _
    $region32: #{tpu_custom_call.1} parent=5 // pred_fallthru
      _
    %p305 = scmp.le.s32.totalorder 2, %s9
    // Predicated region
    $region37: #{tpu_custom_call.1} parent=5 // pred_check
      %p306 = pneg %p305
    $region38: #{tpu_custom_call.1} parent=5 // pred_check_branch
      %308 = sbr.rel (%p306) target = $region40
    $region39: #{tpu_custom_call.1} parent=5 // pred_region
      %s309 = ssub.s32 %s9, 2
      // Predicated region
      $region41: #{tpu_custom_call.1} parent=39 // pred_check
        %p310 = pneg %p147
      $region42: #{tpu_custom_call.1} parent=39 // pred_check_branch
        %312 = sbr.rel (%p310) target = $region44
      $region43: #{tpu_custom_call.1} parent=39 // pred_region
        %p313 = scmp.lt.s32.totalorder %s22, 1
        %s314 = scalar_select %p313, %s22, 1
        %p315 = scmp.lt.s32.totalorder %s23, 0
        %s316 = scalar_select %p315, %s23, 0
        %p317 = scmp.lt.s32.totalorder %s24, 0
        %s318 = scalar_select %p317, %s24, 0
        %s319 = sadd.s32 %s318, %s316
        %s320 = sadd.s32 %s319, %s314
        %s321 = smul.addr %s320, 8
        %s322 = scalar_lea.vmem %s3, %s321
      $region44: #{tpu_custom_call.1} parent=39 // pred_fallthru
        _
    $region40: #{tpu_custom_call.1} parent=5 // pred_fallthru
      _
  $region6: #{tpu_custom_call.1} parent=0 // loop_footer
    %s13 = sadd.s32 1, %s9
  $region7: #{tpu_custom_call.1} parent=0 // loop_footer_branch
    %8 = sbr.rel target = $region3
  $region8: #{tpu_custom_call.1} parent=0 // loop_exit
    _

</llo_original>
